<compile_context>
chip_gen: v6e
topology: v6e:2x2x1
jax: 0.10.0
libtpu: 0.0.40
codegen_flags: <defaults>
</compile_context>

<pallas_src>
import jax
import jax.numpy as jnp
from jax.experimental import pallas as pl
from jax.experimental.pallas import tpu as pltpu


def _attn_ctx_kernel(h_ref, m_ref, wt_ref, b_ref, cv_ref, ctx_ref, attn_ref):
    BB, S, H = h_ref.shape
    h3 = h_ref[...]                                   # [BB, S, H] tile dtype

    # ---- projection: tanh(h @ W^T + b) -------------------------------------
    # Single [BB*S, H] @ [H, H] MXU matmul when the (BB,S)->BB*S merge is
    # sublane-tile preserving; otherwise a 3-D contraction (rare fallback).
    if S % 8 == 0:
        acc = jnp.dot(h3.reshape(BB * S, H), wt_ref[...],
                      preferred_element_type=jnp.float32).reshape(BB, S, H)
    else:
        acc = jnp.einsum("bsh,hk->bsk", h3, wt_ref[...],
                         preferred_element_type=jnp.float32)
    acc = acc + b_ref[...].astype(jnp.float32)        # [BB, S, H] f32

    # tanh on the EUP: bf16 for bf16 tiles (2x EUP rate on v6e/v7x, relieves
    # the binding slot once HBM is fast), f32 otherwise (v5e, f32 callers).
    if h3.dtype == jnp.bfloat16:
        proj = jnp.tanh(acc.astype(jnp.bfloat16))
    else:
        proj = jnp.tanh(acc)

    # ---- scores = proj . context_vector (lane reduce, lane-dense [BB,S]) ----
    cv = cv_ref[...].astype(proj.dtype)               # [1, H]
    scores = jnp.sum((proj * cv).astype(jnp.float32), axis=-1)    # [BB, S]

    # ---- masked softmax over the sequence (lane) axis -----------------------
    scores = jnp.where(m_ref[...] == 0.0, -jnp.inf, scores)
    mx = jnp.max(scores, axis=-1, keepdims=True)
    e = jnp.exp(scores - mx)
    denom = jnp.sum(e, axis=-1, keepdims=True)        # [BB, 1]
    inv = pl.reciprocal(denom, approx=True)           # EUP fast path
    inv = inv * (2.0 - denom * inv)                   # Newton step 1
    inv = inv * (2.0 - denom * inv)                   # Newton step 2 -> f32
    attn = e * inv                                    # [BB, S] f32

    # ---- context = sum_s attn * h -------------------------------------------
    if h3.dtype == jnp.float32:
        # f32 tile: VPU mul + sublane reduce — no cast/copy of the tile, and
        # f32 traffic leaves plenty of VPU/XLU slack.
        ctx = jnp.sum(attn[:, :, None] * h3, axis=1)                  # [BB, H]
    else:
        # bf16 tile: batched MXU contraction (MXU idle after main matmul);
        # avoids the f32 tile copy and the lane->sublane attn broadcast.
        ctx = jnp.einsum("bqs,bsh->bqh", attn.astype(h3.dtype)[:, None, :],
                         h3, preferred_element_type=jnp.float32)
        ctx = ctx.reshape(BB, H)

    ctx_ref[...] = ctx.astype(ctx_ref.dtype)
    attn_ref[...] = attn.astype(attn_ref.dtype)


def _choose_batch_block(B, S, H, itemsize):
    """Pick the per-grid-step batch block BB.

    Goals: (a) per-step working set (double-buffered hidden tile + f32
    temporaries + resident constants) ~<= 20 MiB — safe under v7x's 64 MiB
    physical VMEM and the 32 MiB scoped default on v5e/v6e; (b) BB % 8 == 0 or
    BB == B (sublane-aligned output blocks); (c) prefer a BB that divides B
    and yields >= 2 grid steps so v7x's 2 TensorCores both get work.
    """
    per_row = S * H * (2 * itemsize + 6) + 16 * S + 1024
    const_bytes = 2 * (H * H + 2 * H) * itemsize      # W^T / bias / cv (dbl-buf)
    budget = max(per_row, (20 << 20) - const_bytes)
    cap = max(1, budget // per_row)

    if B <= 8:
        return B                                      # single full-dim block

    target = min(cap, max(8, -(-B // 4)))             # ~4 grid steps when possible
    target = max(8, (target // 8) * 8)                # sublane-aligned
    bb = target
    while bb >= 8:                                    # prefer a divisor of B
        if B % bb == 0:
            return bb
        bb -= 8
    return target                                     # boundary block is masked


def attention_with_context(hidden_states, context_vector, linear_weight,
                           linear_bias, mask=None, *, compute_dtype=None,
                           batch_block=None, vmem_limit_bytes=48 * 1024 * 1024):
    """hidden_states: [B, S, H]; mask: optional [B, S] (1=token, 0=pad).

    Returns (context [B, H], attention_weights [B, S]) in the input dtype.
    compute_dtype (e.g. jnp.bfloat16) optionally downcasts the matmul operands
    (halves HBM traffic / doubles MXU rate); softmax stays f32 regardless.
    """
    B, S, H = hidden_states.shape
    out_dtype = hidden_states.dtype
    cdt = jnp.dtype(out_dtype if compute_dtype is None else compute_dtype)

    # No padding / no copy of the hidden slab in the default path.
    h = hidden_states if hidden_states.dtype == cdt else hidden_states.astype(cdt)
    if mask is None:
        mask = jnp.ones((B, S), dtype=jnp.float32)
    mask = mask.astype(jnp.float32)

    wt = linear_weight.T.astype(cdt)                         # [H, H]
    b_row = linear_bias.astype(jnp.float32).reshape(1, H)    # [1, H]
    cv_row = context_vector.astype(jnp.float32).reshape(1, H)

    if batch_block is None:
        BB = _choose_batch_block(B, S, H, cdt.itemsize)
    elif batch_block >= B:
        BB = B
    else:
        BB = max(8, (batch_block // 8) * 8)           # keep output blocks aligned
    grid = (pl.cdiv(B, BB),)

    ctx, attn = pl.pallas_call(
        _attn_ctx_kernel,
        out_shape=(
            jax.ShapeDtypeStruct((B, H), out_dtype),
            jax.ShapeDtypeStruct((B, S), out_dtype),
        ),
        grid_spec=pltpu.PrefetchScalarGridSpec(
            num_scalar_prefetch=0,
            grid=grid,
            in_specs=[
                pl.BlockSpec((BB, S, H), lambda i: (i, 0, 0)),   # hidden slab
                pl.BlockSpec((BB, S), lambda i: (i, 0)),         # mask
                pl.BlockSpec((H, H), lambda i: (0, 0)),          # W^T (resident)
                pl.BlockSpec((1, H), lambda i: (0, 0)),          # bias row
                pl.BlockSpec((1, H), lambda i: (0, 0)),          # context vec
            ],
            out_specs=(
                pl.BlockSpec((BB, H), lambda i: (i, 0)),         # context out
                pl.BlockSpec((BB, S), lambda i: (i, 0)),         # attention out
            ),
        ),
        compiler_params=pltpu.CompilerParams(
            dimension_semantics=("parallel",),
            vmem_limit_bytes=vmem_limit_bytes),
    )(h, mask, wt, b_row, cv_row)

    return ctx, attn


def _reference(hidden_states, context_vector, linear_weight, linear_bias, mask):
    proj = jnp.tanh(hidden_states @ linear_weight.T + linear_bias)
    scores = jnp.einsum("bsh,h->bs", proj, context_vector)
    scores = jnp.where(mask == 0, -jnp.inf, scores)
    attn = jax.nn.softmax(scores, axis=1)
    ctx = jnp.einsum("bs,bsh->bh", attn, hidden_states)
    return ctx, attn


if __name__ == "__main__":
    B, S, H = 2, 8, 32
    key = jax.random.PRNGKey(0)
    k_h, k_cv, k_w, k_b, k_m = jax.random.split(key, 5)

    hidden_states = jax.random.normal(k_h, (B, S, H), dtype=jnp.float32)
    # nn.init.uniform_(context_vector, -0.1, 0.1)
    context_vector = jax.random.uniform(k_cv, (H,), minval=-0.1, maxval=0.1,
                                        dtype=jnp.float32)
    # nn.Linear default init: U(-1/sqrt(H), 1/sqrt(H)) for weight and bias
    bound = 1.0 / jnp.sqrt(jnp.float32(H))
    linear_weight = jax.random.uniform(k_w, (H, H), minval=-bound, maxval=bound,
                                       dtype=jnp.float32)
    linear_bias = jax.random.uniform(k_b, (H,), minval=-bound, maxval=bound,
                                     dtype=jnp.float32)
    # mask: first 6 / 4 tokens real, rest padding
    mask = jnp.array([[1] * 6 + [0] * 2, [1] * 4 + [0] * 4], dtype=jnp.float32)

    # f32 path (default: no padding, no casts of the hidden slab).
    ctx, attn = attention_with_context(hidden_states, context_vector,
                                       linear_weight, linear_bias, mask)
    jax.block_until_ready((ctx, attn))

    ctx_ref, attn_ref = _reference(hidden_states, context_vector,
                                   linear_weight, linear_bias, mask)
    assert ctx.shape == (B, H) and attn.shape == (B, S)
    assert jnp.allclose(ctx, ctx_ref, atol=1e-5, rtol=1e-5)
    assert jnp.allclose(attn, attn_ref, atol=1e-5, rtol=1e-5)

    # bf16 compute path (bf16 tanh + batched MXU context contraction — the
    # path the perf review targets for v6e/v7x); loose tolerance for bf16.
    ctx_bf, attn_bf = attention_with_context(hidden_states, context_vector,
                                             linear_weight, linear_bias, mask,
                                             compute_dtype=jnp.bfloat16)
    jax.block_until_ready((ctx_bf, attn_bf))
    assert ctx_bf.shape == (B, H) and attn_bf.shape == (B, S)
    assert jnp.allclose(ctx_bf, ctx_ref, atol=5e-2, rtol=5e-2)
    assert jnp.allclose(attn_bf, attn_ref, atol=5e-2, rtol=5e-2)

    print("KERNEL_OK")
</pallas_src>

<mosaic_0001>
module attributes {stable_mosaic.version = 11 : i64} {
  func.func @_attn_ctx_kernel(%arg0: i32, %arg1: memref<2x8x32xf32, #tpu.memory_space<vmem>>, %arg2: memref<2x8xf32, #tpu.memory_space<vmem>>, %arg3: memref<32x32xf32, #tpu.memory_space<vmem>>, %arg4: memref<1x32xf32, #tpu.memory_space<vmem>>, %arg5: memref<1x32xf32, #tpu.memory_space<vmem>>, %arg6: memref<2x32xf32, #tpu.memory_space<vmem>>, %arg7: memref<2x8xf32, #tpu.memory_space<vmem>>) attributes {dimension_semantics = [#tpu.dimension_semantics<parallel>], iteration_bounds = array<i64: 1>, scalar_prefetch = 0 : i64, scratch_operands = 0 : i64, tpu.core_type = #tpu.core_type<tc>, window_params = [{transform_indices = @transform_0, window_bounds = array<i64: 2, 8, 32>}, {transform_indices = @transform_1, window_bounds = array<i64: 2, 8>}, {pipeline_mode = #tpu.pipeline_mode<synchronous>, transform_indices = @transform_2, window_bounds = array<i64: 32, 32>}, {pipeline_mode = #tpu.pipeline_mode<synchronous>, transform_indices = @transform_3, window_bounds = array<i64: 1, 32>}, {pipeline_mode = #tpu.pipeline_mode<synchronous>, transform_indices = @transform_4, window_bounds = array<i64: 1, 32>}, {transform_indices = @transform_5, window_bounds = array<i64: 2, 32>}, {transform_indices = @transform_6, window_bounds = array<i64: 2, 8>}]} {
    %c0 = arith.constant 0 : index
    %c0_0 = arith.constant 0 : index
    %c0_1 = arith.constant 0 : index
    %0 = vector.load %arg1[%c0, %c0_0, %c0_1] : memref<2x8x32xf32, #tpu.memory_space<vmem>>, vector<2x8x32xf32>
    %1 = vector.shape_cast %0 : vector<2x8x32xf32> to vector<16x32xf32>
    %c0_2 = arith.constant 0 : index
    %c0_3 = arith.constant 0 : index
    %2 = vector.load %arg3[%c0_2, %c0_3] : memref<32x32xf32, #tpu.memory_space<vmem>>, vector<32x32xf32>
    %cst = arith.constant dense<0.000000e+00> : vector<16x32xf32>
    %3 = tpu.matmul %1, %2, %cst {dimension_numbers = #tpu.dot_dimension_numbers<[1], [0], [0], [1], [0, 0, 1, 1], [], []>} : vector<16x32xf32>, vector<32x32xf32>, vector<16x32xf32> -> vector<16x32xf32>
    %4 = vector.shape_cast %3 : vector<16x32xf32> to vector<2x8x32xf32>
    %c0_4 = arith.constant 0 : index
    %c0_5 = arith.constant 0 : index
    %5 = vector.load %arg4[%c0_4, %c0_5] : memref<1x32xf32, #tpu.memory_space<vmem>>, vector<1x32xf32>
    %6 = vector.shape_cast %5 : vector<1x32xf32> to vector<1x1x32xf32>
    %7 = vector.broadcast %6 : vector<1x1x32xf32> to vector<2x8x32xf32>
    %8 = arith.addf %4, %7 : vector<2x8x32xf32>
    %9 = math.tanh %8 : vector<2x8x32xf32>
    %c0_6 = arith.constant 0 : index
    %c0_7 = arith.constant 0 : index
    %10 = vector.load %arg5[%c0_6, %c0_7] : memref<1x32xf32, #tpu.memory_space<vmem>>, vector<1x32xf32>
    %11 = vector.shape_cast %10 : vector<1x32xf32> to vector<1x1x32xf32>
    %12 = vector.broadcast %11 : vector<1x1x32xf32> to vector<2x8x32xf32>
    %13 = arith.mulf %9, %12 : vector<2x8x32xf32>
    %cst_8 = arith.constant dense<0.000000e+00> : vector<2x8xf32>
    %14 = vector.multi_reduction <add>, %13, %cst_8 [2] : vector<2x8x32xf32> to vector<2x8xf32>
    %c0_9 = arith.constant 0 : index
    %c0_10 = arith.constant 0 : index
    %15 = vector.load %arg2[%c0_9, %c0_10] : memref<2x8xf32, #tpu.memory_space<vmem>>, vector<2x8xf32>
    %cst_11 = arith.constant 0.000000e+00 : f32
    %16 = vector.broadcast %cst_11 : f32 to vector<2x8xf32>
    %17 = arith.cmpf oeq, %15, %16 : vector<2x8xf32>
    %cst_12 = arith.constant 0xFF800000 : f32
    %18 = vector.broadcast %cst_12 : f32 to vector<2x8xf32>
    %19 = arith.select %17, %18, %14 : vector<2x8xi1>, vector<2x8xf32>
    %cst_13 = arith.constant dense<0xFF800000> : vector<2xf32>
    %20 = vector.multi_reduction <maximumf>, %19, %cst_13 [1] : vector<2x8xf32> to vector<2xf32>
    %21 = vector.shape_cast %20 : vector<2xf32> to vector<2x1xf32>
    %22 = vector.broadcast %21 : vector<2x1xf32> to vector<2x8xf32>
    %23 = arith.subf %19, %22 : vector<2x8xf32>
    %24 = math.exp %23 : vector<2x8xf32>
    %cst_14 = arith.constant dense<0.000000e+00> : vector<2xf32>
    %25 = vector.multi_reduction <add>, %24, %cst_14 [1] : vector<2x8xf32> to vector<2xf32>
    %26 = vector.shape_cast %25 : vector<2xf32> to vector<2x1xf32>
    %27 = tpu.reciprocal %26 {approx = true} : vector<2x1xf32> -> vector<2x1xf32>
    %28 = arith.mulf %26, %27 : vector<2x1xf32>
    %cst_15 = arith.constant 2.000000e+00 : f32
    %29 = vector.broadcast %cst_15 : f32 to vector<2x1xf32>
    %30 = arith.subf %29, %28 : vector<2x1xf32>
    %31 = arith.mulf %27, %30 : vector<2x1xf32>
    %32 = arith.mulf %26, %31 : vector<2x1xf32>
    %cst_16 = arith.constant 2.000000e+00 : f32
    %33 = vector.broadcast %cst_16 : f32 to vector<2x1xf32>
    %34 = arith.subf %33, %32 : vector<2x1xf32>
    %35 = arith.mulf %31, %34 : vector<2x1xf32>
    %36 = vector.broadcast %35 : vector<2x1xf32> to vector<2x8xf32>
    %37 = arith.mulf %24, %36 : vector<2x8xf32>
    %38 = vector.shape_cast %37 : vector<2x8xf32> to vector<2x8x1xf32>
    %39 = vector.broadcast %38 : vector<2x8x1xf32> to vector<2x8x32xf32>
    %40 = arith.mulf %39, %0 : vector<2x8x32xf32>
    %cst_17 = arith.constant dense<0.000000e+00> : vector<2x32xf32>
    %41 = vector.multi_reduction <add>, %40, %cst_17 [1] : vector<2x8x32xf32> to vector<2x32xf32>
    %c0_18 = arith.constant 0 : index
    %c0_19 = arith.constant 0 : index
    %42 = vector.load %arg6[%c0_18, %c0_19] : memref<2x32xf32, #tpu.memory_space<vmem>>, vector<2x32xf32>
    tpu.vector_store %arg6[%c0_18, %c0_19], %41 {strides = array<i32>} : memref<2x32xf32, #tpu.memory_space<vmem>>, vector<2x32xf32>,
    %c0_20 = arith.constant 0 : index
    %c0_21 = arith.constant 0 : index
    %43 = vector.load %arg7[%c0_20, %c0_21] : memref<2x8xf32, #tpu.memory_space<vmem>>, vector<2x8xf32>
    tpu.vector_store %arg7[%c0_20, %c0_21], %37 {strides = array<i32>} : memref<2x8xf32, #tpu.memory_space<vmem>>, vector<2x8xf32>,
    return
  }
  func.func @transform_0(%arg0: i32) -> (i32, i32, i32) {
    %c0_i32 = arith.constant 0 : i32
    %c0_i32_0 = arith.constant 0 : i32
    %c0_i32_1 = arith.constant 0 : i32
    return %arg0, %c0_i32, %c0_i32_0 : i32, i32, i32
  }
  func.func @transform_1(%arg0: i32) -> (i32, i32) {
    %c0_i32 = arith.constant 0 : i32
    %c0_i32_0 = arith.constant 0 : i32
    return %arg0, %c0_i32 : i32, i32
  }
  func.func @transform_2(%arg0: i32) -> (i32, i32) {
    %c0_i32 = arith.constant 0 : i32
    %c0_i32_0 = arith.constant 0 : i32
    %c0_i32_1 = arith.constant 0 : i32
    return %c0_i32, %c0_i32_0 : i32, i32
  }
  func.func @transform_3(%arg0: i32) -> (i32, i32) {
    %c0_i32 = arith.constant 0 : i32
    %c0_i32_0 = arith.constant 0 : i32
    %c0_i32_1 = arith.constant 0 : i32
    return %c0_i32, %c0_i32_0 : i32, i32
  }
  func.func @transform_4(%arg0: i32) -> (i32, i32) {
    %c0_i32 = arith.constant 0 : i32
    %c0_i32_0 = arith.constant 0 : i32
    %c0_i32_1 = arith.constant 0 : i32
    return %c0_i32, %c0_i32_0 : i32, i32
  }
  func.func @transform_5(%arg0: i32) -> (i32, i32) {
    %c0_i32 = arith.constant 0 : i32
    %c0_i32_0 = arith.constant 0 : i32
    return %arg0, %c0_i32 : i32, i32
  }
  func.func @transform_6(%arg0: i32) -> (i32, i32) {
    %c0_i32 = arith.constant 0 : i32
    %c0_i32_0 = arith.constant 0 : i32
    return %arg0, %c0_i32 : i32, i32
  }
}

</mosaic_0001>

<llo_original>
// kernel: tpu_custom_call.1
$region0: #{tpu_custom_call.1}
  #allocation0 [shape = 'u32[]', space=smem, size = 0x4, offset = 0x4, fixed_abs, tag = 'smem constant byte address 0x4 - core index']
  #allocation1 [shape = 'u32[144,128]{1,0:T(1,128)}', space=vmem, size = 0x12000, scoped, tag = 'internal scratch']
  %s0 = inlined_call_operand.hbm [shape: f32[2,8,32], index: 0, kind: input, shape index: {}]
  %s1 = inlined_call_operand.hbm [shape: f32[2,8], index: 1, kind: input, shape index: {}]
  %s2 = inlined_call_operand.hbm [shape: f32[32,32], index: 2, kind: input, shape index: {}]
  %s3 = inlined_call_operand.vmem [shape: f32[1,32], index: 3, kind: input, shape index: {}]
  %s4 = inlined_call_operand.vmem [shape: f32[1,32], index: 4, kind: input, shape index: {}]
  %s5 = inlined_call_operand.hbm [shape: f32[2,32], index: 5, kind: output, shape index: {0}]
  %s6 = inlined_call_operand.hbm [shape: f32[2,8], index: 6, kind: output, shape index: {1}]
  %7 = xla_tuple %s5, %s6
  %s8 = sld [smem:[#allocation0]]
  $region50: #{tpu_custom_call.1} parent=0
    _
  %s10 = ssub.s32 1, %s8
  %s11 = scalar_select 0, %s10, %s8
  $region1: #{tpu_custom_call.1} parent=0
    #allocation2 [shape = 'u8[8192]{0}', space=vmem, size = 0x2000, scoped, tag = 'input window, operand 0, single buffered']
    #allocation3 [shape = 's32[1]{0}', space=sflag, size = 0x4, scoped, tag = 'scoped memory for tpu_custom_call.1']
    #allocation4 [shape = 's32[1]{0}', space=sflag, size = 0x4, scoped, tag = 'scoped memory for tpu_custom_call.1']
    #allocation5 [shape = 'u8[1024]{0}', space=vmem, size = 0x400, scoped, tag = 'input window, operand 1, single buffered']
    #allocation6 [shape = 's32[1]{0}', space=sflag, size = 0x4, scoped, tag = 'scoped memory for tpu_custom_call.1']
    #allocation7 [shape = 'u8[16384]{0}', space=vmem, size = 0x4000, scoped, tag = 'input window, operand 2, single buffered']
    #allocation8 [shape = 'u8[1024]{0}', space=vmem, size = 0x400, scoped, tag = 'output window, operand 0, single buffered']
    #allocation9 [shape = 'u8[1024]{0}', space=vmem, size = 0x400, scoped, tag = 'output window, operand 1, single buffered']
    #allocation10 [shape = 's32[1]{0}', space=sflag, size = 0x4, scoped, tag = 'scoped memory for tpu_custom_call.1']
    %12 = vsyncpa [#allocation3], 0
    %13 = vsyncpa [#allocation6], 0
    %14 = vsyncpa [#allocation4], 0
    %15 = vsyncpa [#allocation10], 0
    // Predicated region
    $region2: #{tpu_custom_call.1} parent=1 // pred_check
      _
    $region3: #{tpu_custom_call.1} parent=1 // pred_check_branch
      %17 = sbr.rel (0) target = $region5
    $region4: #{tpu_custom_call.1} parent=1 // pred_region
      %s19 = ssub.s32 256, 256
      %20 = vsyncadd [#allocation3], %s19
      %s21 = sshll.u32 [#allocation2], 4
      %s22 = int_to_ptr.vmem [resolvable:$true] %s21
      %27 = dma.hbm_to_vmem [thread:$0]  %s0, 256, %s22, [#allocation3], 128, 128, 8
    $region5: #{tpu_custom_call.1} parent=1 // pred_fallthru
      _
    // Predicated region
    $region6: #{tpu_custom_call.1} parent=1 // pred_check
      _
    $region7: #{tpu_custom_call.1} parent=1 // pred_check_branch
      %29 = sbr.rel (0) target = $region9
    $region8: #{tpu_custom_call.1} parent=1 // pred_region
      %s31 = ssub.s32 32, 32
      %32 = vsyncadd [#allocation6], %s31
      %s34 = sshll.u32 [#allocation5], 4
      %s35 = int_to_ptr.vmem [resolvable:$true] %s34
      %37 = dma.hbm_to_vmem [thread:$0]  %s1, 32, %s35, [#allocation6]
    $region9: #{tpu_custom_call.1} parent=1 // pred_fallthru
      _
    // Predicated region
    $region10: #{tpu_custom_call.1} parent=1 // pred_check
      _
    $region11: #{tpu_custom_call.1} parent=1 // pred_check_branch
      %39 = sbr.rel (0) target = $region13
    $region12: #{tpu_custom_call.1} parent=1 // pred_region
      %s41 = ssub.s32 512, 512
      %42 = vsyncadd [#allocation6], %s41
      %s43 = sshll.u32 [#allocation7], 4
      %s44 = int_to_ptr.vmem [resolvable:$true] %s43
      %49 = dma.hbm_to_vmem [thread:$0]  %s2, 512, %s44, [#allocation6], 128, 128, 8
    $region13: #{tpu_custom_call.1} parent=1 // pred_fallthru
      _
    // Predicated region
    $region14: #{tpu_custom_call.1} parent=1 // pred_check
      _
    $region15: #{tpu_custom_call.1} parent=1 // pred_check_branch
      %51 = sbr.rel (0) target = $region17
    $region16: #{tpu_custom_call.1} parent=1 // pred_region
      _
    $region17: #{tpu_custom_call.1} parent=1 // pred_fallthru
      _
    // Predicated region
    $region18: #{tpu_custom_call.1} parent=1 // pred_check
      _
    $region19: #{tpu_custom_call.1} parent=1 // pred_check_branch
      %53 = sbr.rel (0) target = $region21
    $region20: #{tpu_custom_call.1} parent=1 // pred_region
      _
    $region21: #{tpu_custom_call.1} parent=1 // pred_fallthru
      _
    // Predicated region
    $region22: #{tpu_custom_call.1} parent=1 // pred_check
      _
    $region23: #{tpu_custom_call.1} parent=1 // pred_check_branch
      %55 = sbr.rel (0) target = $region25
    $region24: #{tpu_custom_call.1} parent=1 // pred_region
      %56 = dma.done [#allocation3], 256
    $region25: #{tpu_custom_call.1} parent=1 // pred_fallthru
      _
    // Predicated region
    $region26: #{tpu_custom_call.1} parent=1 // pred_check
      _
    $region27: #{tpu_custom_call.1} parent=1 // pred_check_branch
      %58 = sbr.rel (0) target = $region29
    $region28: #{tpu_custom_call.1} parent=1 // pred_region
      %59 = dma.done [#allocation6], 32
    $region29: #{tpu_custom_call.1} parent=1 // pred_fallthru
      _
    // Predicated region
    $region30: #{tpu_custom_call.1} parent=1 // pred_check
      _
    $region31: #{tpu_custom_call.1} parent=1 // pred_check_branch
      %61 = sbr.rel (0) target = $region33
    $region32: #{tpu_custom_call.1} parent=1 // pred_region
      %62 = dma.done [#allocation6], 512
    $region33: #{tpu_custom_call.1} parent=1 // pred_fallthru
      _
    %v63 = vld [vmem:[#allocation2] sm:$0xff]
    %v64 = vld [vmem:[#allocation2 + $0x8] sm:$0xff]
    %v65 = vld [vmem:[#allocation7] sm:$0xff]
    %v66 = vld [vmem:[#allocation7 + $0x8] sm:$0xff]
    %v67 = vld [vmem:[#allocation7 + $0x10] sm:$0xff]
    %v68 = vld [vmem:[#allocation7 + $0x18] sm:$0xff]
    %vm69 = vcmask 261120
    %v71 = vsel %vm69, %v63, 0
    %v74 = vsel %vm69, %v64, 0
    %76 = vmatprep.subr.mxu0 0.0
    %77 = vmatpush1.msra.mxu0 0.0
    %78 = vmatprep.subr.mxu0 0.0
    %79 = vmatpush1.msra.mxu0 0.0
    %80 = vmatprep.subr.mxu0 0.0
    %81 = vmatpush1.msra.mxu0 0.0
    %82 = vmatprep.subr.mxu0 0.0
    %83 = vmatpush1.msra.mxu0 0.0
    %84 = vmatprep.subr.mxu0 0.0
    %85 = vmatpush1.msra.mxu0 0.0
    %86 = vmatprep.subr.mxu0 0.0
    %87 = vmatpush1.msra.mxu0 0.0
    %88 = vmatprep.subr.mxu0 0.0
    %89 = vmatpush1.msra.mxu0 0.0
    %90 = vmatprep.subr.mxu0 0.0
    %91 = vmatpush1.msra.mxu0 0.0
    %92 = vmatprep.subr.mxu0 0.0
    %93 = vmatpush1.msra.mxu0 0.0
    %94 = vmatprep.subr.mxu0 0.0
    %95 = vmatpush1.msra.mxu0 0.0
    %96 = vmatprep.subr.mxu0 0.0
    %97 = vmatpush1.msra.mxu0 0.0
    %98 = vmatprep.subr.mxu0 0.0
    %99 = vmatpush1.msra.mxu0 0.0
    %100 = vmatprep.subr.mxu0 0.0
    %101 = vmatpush1.msra.mxu0 %v68
    %102 = vmatprep.subr.mxu0 0.0
    %103 = vmatpush1.msra.mxu0 %v67
    %104 = vmatprep.subr.mxu0 0.0
    %105 = vmatpush1.msra.mxu0 %v66
    %106 = vmatprep.subr.mxu0 0.0
    %107 = vmatpush1.msra.mxu0 %v65
    %108 = vmatprep.subr.mxu0 0.0
    %109 = vmatpush2.msra.mxu0 0.0
    %110 = vmatprep.subr.mxu0 0.0
    %111 = vmatpush2.msra.mxu0 0.0
    %112 = vmatprep.subr.mxu0 0.0
    %113 = vmatpush2.msra.mxu0 0.0
    %114 = vmatprep.subr.mxu0 0.0
    %115 = vmatpush2.msra.mxu0 0.0
    %116 = vmatprep.subr.mxu0 0.0
    %117 = vmatpush2.msra.mxu0 0.0
    %118 = vmatprep.subr.mxu0 0.0
    %119 = vmatpush2.msra.mxu0 0.0
    %120 = vmatprep.subr.mxu0 0.0
    %121 = vmatpush2.msra.mxu0 0.0
    %122 = vmatprep.subr.mxu0 0.0
    %123 = vmatpush2.msra.mxu0 0.0
    %124 = vmatprep.subr.mxu0 0.0
    %125 = vmatpush2.msra.mxu0 0.0
    %126 = vmatprep.subr.mxu0 0.0
    %127 = vmatpush2.msra.mxu0 0.0
    %128 = vmatprep.subr.mxu0 0.0
    %129 = vmatpush2.msra.mxu0 0.0
    %130 = vmatprep.subr.mxu0 0.0
    %131 = vmatpush2.msra.mxu0 0.0
    %132 = vmatprep.subr.mxu0 0.0
    %133 = vmatpush2.msra.mxu0 0.0
    %134 = vmatprep.subr.mxu0 0.0
    %135 = vmatpush2.msra.mxu0 0.0
    %136 = vmatprep.subr.mxu0 0.0
    %137 = vmatpush2.msra.mxu0 0.0
    %138 = vmatprep.subr.mxu0 0.0
    %139 = vmatpush2.msra.mxu0 0.0
    %140 = vmatprep.mubr.f32.mxu0 0.0
    %141 = vmatmul.mubr.f32.gmra.mxu0 %v71
    %v142 = vpop.f32.mrf.mxu0
    %v143 = vadd.f32 0.0, %v142
    %v144 = vpop.f32.mrf.mxu0
    %145 = vmatprep.mubr.f32.mxu0 0.0
    %146 = vmatmul.mubr.f32.gmra.mxu0 %v74
    %v147 = vpop.f32.mrf.mxu0
    %v148 = vadd.f32 0.0, %v147
    %v149 = vpop.f32.mrf.mxu0
    %150 = vdwg.mxu0
    %v151 = vld [vmem:[%s3] sm:$0x1]
    %v153 = vlaneseq
    %v154 = vshrl.u32 %v153, 7
    %v155 = vsub.s32 0, %v154
    %v156 = vrot.slane %v151, %v155
    %v158 = vadd.f32 %v143, %v156
    %v159 = vadd.f32 %v148, %v156
    %v160 = vtanh.pop %v158
    %v161 = vtanh.pop %v159
    %v162 = vld [vmem:[%s4] sm:$0x1]
    %v164 = vlaneseq
    %v165 = vshrl.u32 %v164, 7
    %v166 = vsub.s32 0, %v165
    %v167 = vrot.slane %v162, %v166
    %v169 = vmul.f32 %v160, %v167
    %v170 = vmul.f32 %v161, %v167
    %v171 = vsel %vm69, %v169, 0.0
    %172 = vadd.xlane.f32.xlu0 %v171
    %v173 = vpop.xlane.xlu0 %172
    %v174 = vsel %vm69, %v170, 0.0
    %175 = vadd.xlane.f32.xlu0 %v174
    %v176 = vpop.xlane.xlu0 %175
    %v177 = vld [vmem:[#allocation5] sm:$0x3]
    %vm178 = vcmp.eq.f32.partialorder %v177, 0.0
    %v181 = vlaneseq
    %v182 = vand.u32 %v181, 127
    %v183 = vlaneseq
    %v184 = vshrl.u32 %v183, 7
    %v185 = vsub.s32 %v182, %v184
    %v186 = vrot.slane %v173, %v185
    %v187 = vlaneseq
    %v188 = vshrl.u32 %v187, 7
    %v189 = vsub.s32 %v182, %v188
    %v190 = vrot.slane %v176, %v189
    %vm191 = vcmask 1041409
    %v192 = vsel %vm191, %v190, %v186
    %v194 = vsel %vm178, -inf, %v192
    %vm195 = vcmask 58368
    %v196 = vsel %vm195, %v194, -inf
    %197 = vmax.xlane.f32.xlu0 %v196
    %v198 = vpop.xlane.xlu0 %197
    %v199 = vsub.f32 %v194, %v198
    %v200 = vmul.f32 %v199, 1.442695
    %v201 = vpow.pop %v200
    %v202 = vsel %vm195, %v201, 0.0
    %203 = vadd.xlane.f32.xlu0 %v202
    %v204 = vpop.xlane.xlu0 %203
    %v205 = vrcp.pop %v204
    %v206 = vmul.f32 %v204, %v205
    %v207 = vsub.f32 2.0, %v206
    %v208 = vmul.f32 %v205, %v207
    %v209 = vmul.f32 %v204, %v208
    %v210 = vsub.f32 2.0, %v209
    %v211 = vmul.f32 %v208, %v210
    %v212 = vmul.f32 %v201, %v211
    %v213 = vlaneseq
    %v214 = vshrl.u32 %v213, 7
    %v215 = vsub.s32 0, %v214
    %v216 = vrot.slane %v212, %v215
    %218 = vbcast.lane.b32.xlu0 %v216, 256
    %v219 = vpop.permute.xlu0 %218
    %v220 = vlaneseq
    %v221 = vshrl.u32 %v220, 7
    %v222 = vsub.s32 1, %v221
    %v223 = vrot.slane %v212, %v222
    %225 = vbcast.lane.b32.xlu0 %v223, 256
    %v226 = vpop.permute.xlu0 %225
    %v227 = vmul.f32 %v219, %v63
    %v228 = vmul.f32 %v226, %v64
    %v229 = vsel %vm69, %v227, 0.0
    %v230 = vrot.slane %v229, 4
    %v231 = vadd.f32 %v229, %v230
    %v232 = vrot.slane %v231, 2
    %v233 = vadd.f32 %v231, %v232
    %v234 = vrot.slane %v233, 1
    %v235 = vadd.f32 %v233, %v234
    %v236 = vsel %vm69, %v228, 0.0
    %v237 = vrot.slane %v236, 4
    %v238 = vadd.f32 %v236, %v237
    %v239 = vrot.slane %v238, 2
    %v240 = vadd.f32 %v238, %v239
    %v241 = vrot.slane %v240, 1
    %v242 = vadd.f32 %v240, %v241
    %v245 = vsel %vm191, %v242, %v235
    %vm247 = vcmask 254976
    %248 = vst.msk [vmem:[#allocation8] sm:$0x3] %vm247, %v245
    %249 = vst.msk [vmem:[#allocation9] sm:$0x3] %vm195, %v212
    // Predicated region
    $region34: #{tpu_custom_call.1} parent=1 // pred_check
      _
    $region35: #{tpu_custom_call.1} parent=1 // pred_check_branch
      %251 = sbr.rel (0) target = $region37
    $region36: #{tpu_custom_call.1} parent=1 // pred_region
      %s253 = ssub.s32 32, 32
      %254 = vsyncadd [#allocation4], %s253
      %s256 = sshll.u32 [#allocation8], 4
      %s257 = int_to_ptr.vmem [resolvable:$true] %s256
      %259 = dma.vmem_to_hbm [thread:$0]  %s257, 32, %s5, [#allocation4]
    $region37: #{tpu_custom_call.1} parent=1 // pred_fallthru
      _
    // Predicated region
    $region38: #{tpu_custom_call.1} parent=1 // pred_check
      _
    $region39: #{tpu_custom_call.1} parent=1 // pred_check_branch
      %261 = sbr.rel (0) target = $region41
    $region40: #{tpu_custom_call.1} parent=1 // pred_region
      %s263 = ssub.s32 32, 32
      %264 = vsyncadd [#allocation10], %s263
      %s266 = sshll.u32 [#allocation9], 4
      %s267 = int_to_ptr.vmem [resolvable:$true] %s266
      %269 = dma.vmem_to_hbm [thread:$0]  %s267, 32, %s6, [#allocation10]
    $region41: #{tpu_custom_call.1} parent=1 // pred_fallthru
      _
    // Predicated region
    $region42: #{tpu_custom_call.1} parent=1 // pred_check
      _
    $region43: #{tpu_custom_call.1} parent=1 // pred_check_branch
      %271 = sbr.rel (0) target = $region45
    $region44: #{tpu_custom_call.1} parent=1 // pred_region
      %272 = dma.done [#allocation4], 32
    $region45: #{tpu_custom_call.1} parent=1 // pred_fallthru
      _
    // Predicated region
    $region46: #{tpu_custom_call.1} parent=1 // pred_check
      _
    $region47: #{tpu_custom_call.1} parent=1 // pred_check_branch
      %274 = sbr.rel (0) target = $region49
    $region48: #{tpu_custom_call.1} parent=1 // pred_region
      %275 = dma.done [#allocation10], 32
    $region49: #{tpu_custom_call.1} parent=1 // pred_fallthru
      _
    %276 = vsyncpa [#allocation3], 1
    %277 = vsyncpa [#allocation6], 1
    %278 = vsyncpa [#allocation4], 1
    %279 = vsyncpa [#allocation10], 1

</llo_original>
